<compile_context>
chip_gen: v7x
topology: tpu7x:2x2x1
jax: 0.10.0
libtpu: 0.0.40
codegen_flags: <defaults>
</compile_context>

<pallas_src>
import functools

import jax
import jax.numpy as jnp
from jax import lax
from jax.experimental import pallas as pl
from jax.experimental.pallas import tpu as pltpu


# ----------------------------- kernels ---------------------------------------


def _fused_kernel(x_ref, w1t_ref, w2t_ref, o_ref, *, bb, hw_true):
    """Single pass: pooled reduce + shared MLP + sigmoid gate + rescale.

    Blocks: x/o (Bb, C, HW) with HW = full spatial extent (lane axis),
            w1t (C, C//r), w2t (C//r, C) resident across the grid.
    """
    x = x_ref[...]                                            # native dtype

    # AdaptiveAvg/MaxPool2d over spatial -> lane reductions with f32 accumulation
    # (reduce carries the accumulation dtype; no full-tile f32 copy).
    avg = jnp.sum(x, axis=-1, dtype=jnp.float32) * (1.0 / hw_true)   # (Bb, C)
    mx = jnp.max(x, axis=-1).astype(jnp.float32)                     # (Bb, C)

    # Shared MLP fused: one pair of MXU dots for both pooled vectors of all rows.
    p = jnp.concatenate([avg, mx], axis=0)                    # (2*Bb, C)
    h = jnp.maximum(jnp.dot(p, w1t_ref[...], preferred_element_type=jnp.float32), 0.0)
    y = jnp.dot(h, w2t_ref[...], preferred_element_type=jnp.float32)  # (2*Bb, C)
    gate = jax.nn.sigmoid(y[:bb] + y[bb:])                    # (Bb, C) f32

    # Rescale in native dtype (gate broadcast across lanes).
    o_ref[...] = (x * gate.astype(x.dtype)[:, :, None]).astype(o_ref.dtype)


def _reduce_gate_kernel(x_ref, w1t_ref, w2t_ref, gate_ref, sum_sc, max_sc,
                        *, bb, hw_true, thw):
    """Two-pass, pass 1: accumulate avg/max over HW tiles, emit gate at the end."""
    hw_i = pl.program_id(1)

    @pl.when(hw_i == 0)
    def _():
        sum_sc[...] = jnp.zeros_like(sum_sc)
        max_sc[...] = jnp.full_like(max_sc, -jnp.inf)

    x = x_ref[...]                                            # (Bb, C, Thw)
    if hw_true % thw != 0:
        # Only the last HW block is partial; mask its out-of-range lanes so the
        # unspecified tail can't pollute the sum / max.
        lane = lax.broadcasted_iota(jnp.int32, x.shape, 2) + hw_i * thw
        valid = lane < hw_true
        xs = jnp.where(valid, x, jnp.zeros((), x.dtype))
        xm = jnp.where(valid, x, jnp.full((), -jnp.inf, x.dtype))
    else:
        xs, xm = x, x

    sum_sc[...] += jnp.sum(xs, axis=-1, dtype=jnp.float32)
    max_sc[...] = jnp.maximum(max_sc[...], jnp.max(xm, axis=-1).astype(jnp.float32))

    @pl.when(hw_i == pl.num_programs(1) - 1)
    def _():
        avg = sum_sc[...] * (1.0 / hw_true)                   # (Bb, C)
        p = jnp.concatenate([avg, max_sc[...]], axis=0)       # (2*Bb, C)
        h = jnp.maximum(jnp.dot(p, w1t_ref[...], preferred_element_type=jnp.float32), 0.0)
        y = jnp.dot(h, w2t_ref[...], preferred_element_type=jnp.float32)
        gate_ref[...] = jax.nn.sigmoid(y[:bb] + y[bb:])


def _rescale_kernel(gate_ref, x_ref, o_ref):
    """Two-pass, pass 2: stream HW tiles of out = x * gate."""
    x = x_ref[...]
    o_ref[...] = (x * gate_ref[...].astype(x.dtype)[:, :, None]).astype(o_ref.dtype)


# ----------------------------- wrapper ----------------------------------------


def _tpu_limits():
    """Best-effort (VMEM capacity, TensorCore count) with conservative fallbacks."""
    vmem_cap = 64 << 20          # v7x per-core size; safe lower bound everywhere
    n_cores = 1                  # megacore Bb-shrink only when >=2 TCs detected
    try:
        info = pltpu.get_tpu_info()
        vmem_cap = int(getattr(info, "vmem_capacity_bytes", vmem_cap))
        for attr in ("num_cores", "num_tensorcores", "tensorcore_count", "core_count"):
            v = getattr(info, attr, None)
            if v:
                n_cores = int(v)
                break
    except Exception:
        pass
    return vmem_cap, n_cores


@functools.partial(jax.jit, static_argnames=("force_two_pass", "force_thw", "force_bb"))
def channel_attention(x, w1, w2, *, force_two_pass=False, force_thw=None, force_bb=None):
    """x: (B, C, H, W); w1: (C//r, C); w2: (C, C//r). Returns (B, C, H, W)."""
    B, C, H, W = x.shape
    Cr = w1.shape[0]
    HW = H * W

    # NCHW -> (B, C, HW): trailing-dim merge, no HBM copy.  No padding: BlockSpec
    # allows a non-128-multiple last dim when it equals the full array dim.
    x_flat = x.reshape(B, C, HW)

    # Transposed f32 weights: cast once here (not per grid step in the kernel),
    # fused MLP becomes two plain row-major MXU dots.
    w1t = jnp.asarray(w1, jnp.float32).T                      # (C, C//r)
    w2t = jnp.asarray(w2, jnp.float32).T                      # (C//r, C)
    w_bytes = (w1t.size + w2t.size) * 4

    # --- generation-aware tile sizing (op is pure HBM bandwidth) -------------
    vmem_cap, n_cores = _tpu_limits()
    itemsize = jnp.dtype(x.dtype).itemsize
    bytes_per_batch = C * HW * itemsize
    target_tile = 4 << 20                                     # ~4 MiB per grid step
    # 2x double-buffered (in + out) tiles + weights must stay well inside VMEM:
    # cap ≈ 8 MiB on v7x (64 MiB), 16 MiB on v5e/v6e (128 MiB).
    tile_cap = max(1 << 20, min(vmem_cap // 8, 16 << 20) - w_bytes)

    two_pass = bool(force_two_pass) or (bytes_per_batch > tile_cap)

    if not two_pass:
        # ------------- single pass: one (Bb, C, HW) tile per grid step -------
        Bb = max(1, min(B,
                        target_tile // max(1, bytes_per_batch),
                        tile_cap // max(1, bytes_per_batch)))
        if n_cores >= 2 and B >= 2 and Bb > pl.cdiv(B, 2):
            Bb = pl.cdiv(B, 2)                                # >=2 steps for megacore
        if force_bb is not None:
            Bb = int(force_bb)
        # Partial last batch block is fine: per-row pooling/gating is independent,
        # OOB reads stay in discarded rows and OOB writes are dropped.
        grid_b = pl.cdiv(B, Bb)

        tile_bytes = Bb * bytes_per_batch
        vmem_limit = int(min(max(4 * tile_bytes + 2 * w_bytes + (4 << 20), 32 << 20),
                             vmem_cap - (8 << 20)))

        kernel = functools.partial(_fused_kernel, bb=Bb, hw_true=HW)
        out_flat = pl.pallas_call(
            kernel,
            out_shape=jax.ShapeDtypeStruct((B, C, HW), x.dtype),
            grid_spec=pltpu.PrefetchScalarGridSpec(
                num_scalar_prefetch=0,
                grid=(grid_b,),
                in_specs=[
                    pl.BlockSpec((Bb, C, HW), lambda b: (b, 0, 0)),
                    pl.BlockSpec((C, Cr), lambda b: (0, 0)),   # resident across grid
                    pl.BlockSpec((Cr, C), lambda b: (0, 0)),   # resident across grid
                ],
                out_specs=pl.BlockSpec((Bb, C, HW), lambda b: (b, 0, 0)),
            ),
            compiler_params=pltpu.CompilerParams(
                dimension_semantics=("parallel",),
                vmem_limit_bytes=vmem_limit),
        )(x_flat, w1t, w2t)
        return out_flat.reshape(B, C, H, W)

    # ------------- two pass: HW-tiled reduce + gate, then streamed rescale ---
    # A single batch element is too big for one tile; stream Thw-lane chunks.
    Bb = 1
    Thw = max(128, (min(target_tile, tile_cap) // max(1, C * itemsize)) // 128 * 128)
    if force_thw is not None:
        Thw = int(force_thw)
    elif Thw >= HW:
        Thw = HW
    grid_hw = pl.cdiv(HW, Thw)

    tile_bytes = C * Thw * itemsize
    vmem_limit = int(min(max(4 * tile_bytes + 2 * w_bytes + (4 << 20), 32 << 20),
                         vmem_cap - (8 << 20)))

    reduce_kernel = functools.partial(_reduce_gate_kernel, bb=Bb, hw_true=HW, thw=Thw)
    gate = pl.pallas_call(
        reduce_kernel,
        out_shape=jax.ShapeDtypeStruct((B, C), jnp.float32),
        grid_spec=pltpu.PrefetchScalarGridSpec(
            num_scalar_prefetch=0,
            grid=(B, grid_hw),                                # reduction axis last
            in_specs=[
                pl.BlockSpec((Bb, C, Thw), lambda b, k: (b, 0, k)),
                pl.BlockSpec((C, Cr), lambda b, k: (0, 0)),
                pl.BlockSpec((Cr, C), lambda b, k: (0, 0)),
            ],
            out_specs=pl.BlockSpec((Bb, C), lambda b, k: (b, 0)),   # resident over k
            scratch_shapes=[pltpu.VMEM((Bb, C), jnp.float32),       # sum accumulator
                            pltpu.VMEM((Bb, C), jnp.float32)],      # max accumulator
        ),
        compiler_params=pltpu.CompilerParams(
            dimension_semantics=("parallel", "arbitrary"),
            vmem_limit_bytes=vmem_limit),
    )(x_flat, w1t, w2t)

    # Pass 2 re-reads x (1.5x total HBM traffic vs single pass) but always fits.
    out_flat = pl.pallas_call(
        _rescale_kernel,
        out_shape=jax.ShapeDtypeStruct((B, C, HW), x.dtype),
        grid_spec=pltpu.PrefetchScalarGridSpec(
            num_scalar_prefetch=0,
            grid=(B, grid_hw),
            in_specs=[
                pl.BlockSpec((Bb, C), lambda b, k: (b, 0)),
                pl.BlockSpec((Bb, C, Thw), lambda b, k: (b, 0, k)),
            ],
            out_specs=pl.BlockSpec((Bb, C, Thw), lambda b, k: (b, 0, k)),
        ),
        compiler_params=pltpu.CompilerParams(
            dimension_semantics=("parallel", "parallel"),
            vmem_limit_bytes=vmem_limit),
    )(gate, x_flat)
    return out_flat.reshape(B, C, H, W)


# ----------------------------- reference --------------------------------------


def channel_attention_ref(x, w1, w2):
    """Pure-JAX reference mirroring the PyTorch forward."""
    avg = jnp.mean(x, axis=(2, 3))                            # (B, C)
    mx = jnp.max(x, axis=(2, 3))                              # (B, C)

    def mlp(p):                                               # p: (B, C)
        h = jnp.maximum(p @ w1.T, 0.0)                        # (B, C//r)
        return h @ w2.T                                       # (B, C)

    gate = jax.nn.sigmoid(mlp(avg) + mlp(mx))                 # (B, C)
    return x * gate[:, :, None, None]


if __name__ == "__main__":
    B, C, H, W = 2, 32, 16, 16
    r = 4
    Cr = C // r

    key = jax.random.PRNGKey(0)
    kx, k1, k2, kx2 = jax.random.split(key, 4)

    # Conv2d(C, C//r, 1, bias=False) weight -> (C//r, C); Conv2d(C//r, C, 1) -> (C, C//r)
    w1 = jax.random.normal(k1, (Cr, C), dtype=jnp.float32) * (1.0 / jnp.sqrt(C))
    w2 = jax.random.normal(k2, (C, Cr), dtype=jnp.float32) * (1.0 / jnp.sqrt(Cr))

    # 1) Main path: single fused pass.
    x = jax.random.normal(kx, (B, C, H, W), dtype=jnp.float32)
    out = jax.block_until_ready(channel_attention(x, w1, w2))
    ref = channel_attention_ref(x, w1, w2)
    assert out.shape == (B, C, H, W)
    assert jnp.allclose(out, ref, atol=1e-5, rtol=1e-5), (
        float(jnp.max(jnp.abs(out - ref))))

    # 2) Two-pass (HW-tiled) path: non-128-multiple HW with a partial last tile.
    x2 = jax.random.normal(kx2, (B, C, 20, 20), dtype=jnp.float32)
    out2 = jax.block_until_ready(
        channel_attention(x2, w1, w2, force_two_pass=True, force_thw=128))
    ref2 = channel_attention_ref(x2, w1, w2)
    assert jnp.allclose(out2, ref2, atol=1e-5, rtol=1e-5), (
        float(jnp.max(jnp.abs(out2 - ref2))))

    # 3) Single-pass with a partial last batch block (B=3, Bb=2).
    x3 = jax.random.normal(kx, (3, C, H, W), dtype=jnp.float32)
    out3 = jax.block_until_ready(channel_attention(x3, w1, w2, force_bb=2))
    ref3 = channel_attention_ref(x3, w1, w2)
    assert jnp.allclose(out3, ref3, atol=1e-5, rtol=1e-5), (
        float(jnp.max(jnp.abs(out3 - ref3))))

    print("KERNEL_OK")
</pallas_src>

<mosaic_0001>
module attributes {stable_mosaic.version = 11 : i64} {
  func.func @_fused_kernel(%arg0: i32, %arg1: memref<2x32x256xf32, #tpu.memory_space<vmem>>, %arg2: memref<32x8xf32, #tpu.memory_space<vmem>>, %arg3: memref<8x32xf32, #tpu.memory_space<vmem>>, %arg4: memref<2x32x256xf32, #tpu.memory_space<vmem>>) attributes {dimension_semantics = [#tpu.dimension_semantics<parallel>], iteration_bounds = array<i64: 1>, scalar_prefetch = 0 : i64, scratch_operands = 0 : i64, tpu.core_type = #tpu.core_type<tc>, window_params = [{transform_indices = @transform_0, window_bounds = array<i64: 2, 32, 256>}, {pipeline_mode = #tpu.pipeline_mode<synchronous>, transform_indices = @transform_1, window_bounds = array<i64: 32, 8>}, {pipeline_mode = #tpu.pipeline_mode<synchronous>, transform_indices = @transform_2, window_bounds = array<i64: 8, 32>}, {transform_indices = @transform_3, window_bounds = array<i64: 2, 32, 256>}]} {
    %c0 = arith.constant 0 : index
    %c0_0 = arith.constant 0 : index
    %c0_1 = arith.constant 0 : index
    %0 = vector.load %arg1[%c0, %c0_0, %c0_1] : memref<2x32x256xf32, #tpu.memory_space<vmem>>, vector<2x32x256xf32>
    %cst = arith.constant dense<0.000000e+00> : vector<2x32xf32>
    %1 = vector.multi_reduction <add>, %0, %cst [2] : vector<2x32x256xf32> to vector<2x32xf32>
    %cst_2 = arith.constant 3.906250e-03 : f32
    %2 = vector.broadcast %cst_2 : f32 to vector<2x32xf32>
    %3 = arith.mulf %1, %2 : vector<2x32xf32>
    %cst_3 = arith.constant dense<0xFF800000> : vector<2x32xf32>
    %4 = vector.multi_reduction <maximumf>, %0, %cst_3 [2] : vector<2x32x256xf32> to vector<2x32xf32>
    %5 = tpu.concatenate %3, %4 in 0 : vector<2x32xf32>, vector<2x32xf32> -> vector<4x32xf32>
    %c0_4 = arith.constant 0 : index
    %c0_5 = arith.constant 0 : index
    %6 = vector.load %arg2[%c0_4, %c0_5] : memref<32x8xf32, #tpu.memory_space<vmem>>, vector<32x8xf32>
    %cst_6 = arith.constant dense<0.000000e+00> : vector<4x8xf32>
    %7 = tpu.matmul %5, %6, %cst_6 {dimension_numbers = #tpu.dot_dimension_numbers<[1], [0], [0], [1], [0, 0, 1, 1], [], []>} : vector<4x32xf32>, vector<32x8xf32>, vector<4x8xf32> -> vector<4x8xf32>
    %cst_7 = arith.constant 0.000000e+00 : f32
    %8 = vector.broadcast %cst_7 : f32 to vector<4x8xf32>
    %9 = arith.maximumf %7, %8 : vector<4x8xf32>
    %c0_8 = arith.constant 0 : index
    %c0_9 = arith.constant 0 : index
    %10 = vector.load %arg3[%c0_8, %c0_9] : memref<8x32xf32, #tpu.memory_space<vmem>>, vector<8x32xf32>
    %cst_10 = arith.constant dense<0.000000e+00> : vector<4x32xf32>
    %11 = tpu.matmul %9, %10, %cst_10 {dimension_numbers = #tpu.dot_dimension_numbers<[1], [0], [0], [1], [0, 0, 1, 1], [], []>} : vector<4x8xf32>, vector<8x32xf32>, vector<4x32xf32> -> vector<4x32xf32>
    %12 = vector.extract_strided_slice %11 {offsets = [0, 0], sizes = [2, 32], strides = [1, 1]} : vector<4x32xf32> to vector<2x32xf32>
    %13 = vector.extract_strided_slice %11 {offsets = [2, 0], sizes = [2, 32], strides = [1, 1]} : vector<4x32xf32> to vector<2x32xf32>
    %14 = arith.addf %12, %13 : vector<2x32xf32>
    %15 = arith.negf %14 : vector<2x32xf32>
    %16 = math.exp %15 : vector<2x32xf32>
    %cst_11 = arith.constant 1.000000e+00 : f32
    %17 = vector.broadcast %cst_11 : f32 to vector<2x32xf32>
    %18 = arith.addf %17, %16 : vector<2x32xf32>
    %19 = arith.divf %17, %18 : vector<2x32xf32>
    %20 = vector.shape_cast %19 : vector<2x32xf32> to vector<2x32x1xf32>
    %21 = vector.broadcast %20 : vector<2x32x1xf32> to vector<2x32x256xf32>
    %22 = arith.mulf %0, %21 : vector<2x32x256xf32>
    %c0_12 = arith.constant 0 : index
    %c0_13 = arith.constant 0 : index
    %c0_14 = arith.constant 0 : index
    %23 = vector.load %arg4[%c0_12, %c0_13, %c0_14] : memref<2x32x256xf32, #tpu.memory_space<vmem>>, vector<2x32x256xf32>
    tpu.vector_store %arg4[%c0_12, %c0_13, %c0_14], %22 {strides = array<i32>} : memref<2x32x256xf32, #tpu.memory_space<vmem>>, vector<2x32x256xf32>,
    return
  }
  func.func @transform_0(%arg0: i32) -> (i32, i32, i32) {
    %c0_i32 = arith.constant 0 : i32
    %c0_i32_0 = arith.constant 0 : i32
    %c0_i32_1 = arith.constant 0 : i32
    return %arg0, %c0_i32, %c0_i32_0 : i32, i32, i32
  }
  func.func @transform_1(%arg0: i32) -> (i32, i32) {
    %c0_i32 = arith.constant 0 : i32
    %c0_i32_0 = arith.constant 0 : i32
    %c0_i32_1 = arith.constant 0 : i32
    return %c0_i32, %c0_i32_0 : i32, i32
  }
  func.func @transform_2(%arg0: i32) -> (i32, i32) {
    %c0_i32 = arith.constant 0 : i32
    %c0_i32_0 = arith.constant 0 : i32
    %c0_i32_1 = arith.constant 0 : i32
    return %c0_i32, %c0_i32_0 : i32, i32
  }
  func.func @transform_3(%arg0: i32) -> (i32, i32, i32) {
    %c0_i32 = arith.constant 0 : i32
    %c0_i32_0 = arith.constant 0 : i32
    %c0_i32_1 = arith.constant 0 : i32
    return %arg0, %c0_i32, %c0_i32_0 : i32, i32, i32
  }
}

</mosaic_0001>

<llo_original>
// kernel: channel_attention.1
$region0: #{channel_attention.1}
  #allocation0 [shape = 'u32[]', space=smem, size = 0x4, offset = 0x4, fixed_abs, tag = 'smem constant byte address 0x4 - core index']
  #allocation1 [shape = 'u32[144,128]{1,0:T(1,128)}', space=vmem, size = 0x12000, scoped, tag = 'internal scratch']
  %s0 = inlined_call_operand.vmem [shape: f32[2,32,256], index: 0, kind: input, shape index: {}]
  %s1 = inlined_call_operand.vmem [shape: f32[32,8], index: 1, kind: input, shape index: {}]
  %s2 = inlined_call_operand.vmem [shape: f32[8,32], index: 2, kind: input, shape index: {}]
  %s3 = inlined_call_operand.vmem [shape: f32[2,32,256], index: 3, kind: output, shape index: {}]
  %s4 = sld [smem:[#allocation0]]
  $region22: #{channel_attention.1} parent=0
    _
  %s6 = ssub.s32 1, %s4
  %s7 = scalar_select 0, %s6, %s4
  // Predicated region
  $region2: #{channel_attention.1} parent=0 // pred_check
    _
  $region3: #{channel_attention.1} parent=0 // pred_check_branch
    %9 = sbr.rel (0) target = $region5
  $region4: #{channel_attention.1} parent=0 // pred_region
    _
  $region5: #{channel_attention.1} parent=0 // pred_fallthru
    _
  // Predicated region
  $region6: #{channel_attention.1} parent=0 // pred_check
    _
  $region7: #{channel_attention.1} parent=0 // pred_check_branch
    %11 = sbr.rel (0) target = $region9
  $region8: #{channel_attention.1} parent=0 // pred_region
    _
  $region9: #{channel_attention.1} parent=0 // pred_fallthru
    _
  // Predicated region
  $region10: #{channel_attention.1} parent=0 // pred_check
    _
  $region11: #{channel_attention.1} parent=0 // pred_check_branch
    %13 = sbr.rel (0) target = $region13
  $region12: #{channel_attention.1} parent=0 // pred_region
    _
  $region13: #{channel_attention.1} parent=0 // pred_fallthru
    _
  %v14 = vld [vmem:[%s0] sm:$0xff]
  %v15 = vld [vmem:[%s0 + $0x8] sm:$0xff]
  %v16 = vld [vmem:[%s0 + $0x10] sm:$0xff]
  %v17 = vld [vmem:[%s0 + $0x18] sm:$0xff]
  %v18 = vld [vmem:[%s0 + $0x20] sm:$0xff]
  %v19 = vld [vmem:[%s0 + $0x28] sm:$0xff]
  %v20 = vld [vmem:[%s0 + $0x30] sm:$0xff]
  %v21 = vld [vmem:[%s0 + $0x38] sm:$0xff]
  %v22 = vld [vmem:[%s0 + $0x40] sm:$0xff]
  %v23 = vld [vmem:[%s0 + $0x48] sm:$0xff]
  %v24 = vld [vmem:[%s0 + $0x50] sm:$0xff]
  %v25 = vld [vmem:[%s0 + $0x58] sm:$0xff]
  %v26 = vld [vmem:[%s0 + $0x60] sm:$0xff]
  %v27 = vld [vmem:[%s0 + $0x68] sm:$0xff]
  %v28 = vld [vmem:[%s0 + $0x70] sm:$0xff]
  %v29 = vld [vmem:[%s0 + $0x78] sm:$0xff]
  %v30 = vadd.f32 %v14, %v15
  %31 = vadd.xlane.f32.xlu0 %v30
  %v32 = vpop.xlane.xlu0 %31
  %v33 = vadd.f32 %v16, %v17
  %34 = vadd.xlane.f32.xlu0 %v33
  %v35 = vpop.xlane.xlu0 %34
  %v36 = vadd.f32 %v18, %v19
  %37 = vadd.xlane.f32.xlu0 %v36
  %v38 = vpop.xlane.xlu0 %37
  %v39 = vadd.f32 %v20, %v21
  %40 = vadd.xlane.f32.xlu0 %v39
  %v41 = vpop.xlane.xlu0 %40
  %v42 = vadd.f32 %v22, %v23
  %43 = vadd.xlane.f32.xlu0 %v42
  %v44 = vpop.xlane.xlu0 %43
  %v45 = vadd.f32 %v24, %v25
  %46 = vadd.xlane.f32.xlu0 %v45
  %v47 = vpop.xlane.xlu0 %46
  %v48 = vadd.f32 %v26, %v27
  %49 = vadd.xlane.f32.xlu0 %v48
  %v50 = vpop.xlane.xlu0 %49
  %v51 = vadd.f32 %v28, %v29
  %52 = vadd.xlane.f32.xlu0 %v51
  %v53 = vpop.xlane.xlu0 %52
  %v54 = vmul.f32 %v32, 0.00390625
  %v55 = vmul.f32 %v35, 0.00390625
  %v56 = vmul.f32 %v38, 0.00390625
  %v57 = vmul.f32 %v41, 0.00390625
  %v58 = vmul.f32 %v44, 0.00390625
  %v59 = vmul.f32 %v47, 0.00390625
  %v60 = vmul.f32 %v50, 0.00390625
  %v61 = vmul.f32 %v53, 0.00390625
  %v62 = vmax.f32 %v14, %v15
  %63 = vmax.xlane.f32.xlu0 %v62
  %v64 = vpop.xlane.xlu0 %63
  %v65 = vmax.f32 %v16, %v17
  %66 = vmax.xlane.f32.xlu0 %v65
  %v67 = vpop.xlane.xlu0 %66
  %v68 = vmax.f32 %v18, %v19
  %69 = vmax.xlane.f32.xlu0 %v68
  %v70 = vpop.xlane.xlu0 %69
  %v71 = vmax.f32 %v20, %v21
  %72 = vmax.xlane.f32.xlu0 %v71
  %v73 = vpop.xlane.xlu0 %72
  %v74 = vmax.f32 %v22, %v23
  %75 = vmax.xlane.f32.xlu0 %v74
  %v76 = vpop.xlane.xlu0 %75
  %v77 = vmax.f32 %v24, %v25
  %78 = vmax.xlane.f32.xlu0 %v77
  %v79 = vpop.xlane.xlu0 %78
  %v80 = vmax.f32 %v26, %v27
  %81 = vmax.xlane.f32.xlu0 %v80
  %v82 = vpop.xlane.xlu0 %81
  %v83 = vmax.f32 %v28, %v29
  %84 = vmax.xlane.f32.xlu0 %v83
  %v85 = vpop.xlane.xlu0 %84
  %v94 = vlaneseq
  %v95 = vand.u32 %v94, 127
  %v96 = vlaneseq
  %v97 = vshrl.u32 %v96, 7
  %v98 = vsub.s32 %v95, %v97
  %v99 = vrot.slane %v54, %v98
  %v100 = vadd.s32 %v95, 4294967288
  %v101 = vlaneseq
  %v102 = vshrl.u32 %v101, 7
  %v103 = vsub.s32 %v100, %v102
  %v104 = vrot.slane %v55, %v103
  %vm105 = vcmask 130112
  %v106 = vsel %vm105, %v104, %v99
  %v107 = vadd.s32 %v95, 4294967280
  %v108 = vlaneseq
  %v109 = vshrl.u32 %v108, 7
  %v110 = vsub.s32 %v107, %v109
  %v111 = vrot.slane %v56, %v110
  %vm112 = vcmask 195712
  %v113 = vsel %vm112, %v111, %v106
  %v114 = vadd.s32 %v95, 4294967272
  %v115 = vlaneseq
  %v116 = vshrl.u32 %v115, 7
  %v117 = vsub.s32 %v114, %v116
  %v118 = vrot.slane %v57, %v117
  %vm119 = vcmask 261312
  %v120 = vsel %vm119, %v118, %v113
  %v121 = vlaneseq
  %v122 = vshrl.u32 %v121, 7
  %v123 = vsub.s32 %v95, %v122
  %v124 = vrot.slane %v58, %v123
  %v125 = vlaneseq
  %v126 = vshrl.u32 %v125, 7
  %v127 = vsub.s32 %v100, %v126
  %v128 = vrot.slane %v59, %v127
  %v129 = vsel %vm105, %v128, %v124
  %v130 = vlaneseq
  %v131 = vshrl.u32 %v130, 7
  %v132 = vsub.s32 %v107, %v131
  %v133 = vrot.slane %v60, %v132
  %v134 = vsel %vm112, %v133, %v129
  %v135 = vlaneseq
  %v136 = vshrl.u32 %v135, 7
  %v137 = vsub.s32 %v114, %v136
  %v138 = vrot.slane %v61, %v137
  %v139 = vsel %vm119, %v138, %v134
  %vm140 = vcmask 1041409
  %v141 = vsel %vm140, %v139, %v120
  %v151 = vlaneseq
  %v152 = vshrl.u32 %v151, 7
  %v153 = vsub.s32 %v95, %v152
  %v154 = vrot.slane %v64, %v153
  %v155 = vlaneseq
  %v156 = vshrl.u32 %v155, 7
  %v157 = vsub.s32 %v100, %v156
  %v158 = vrot.slane %v67, %v157
  %v159 = vsel %vm105, %v158, %v154
  %v160 = vlaneseq
  %v161 = vshrl.u32 %v160, 7
  %v162 = vsub.s32 %v107, %v161
  %v163 = vrot.slane %v70, %v162
  %v164 = vsel %vm112, %v163, %v159
  %v165 = vlaneseq
  %v166 = vshrl.u32 %v165, 7
  %v167 = vsub.s32 %v114, %v166
  %v168 = vrot.slane %v73, %v167
  %v169 = vsel %vm119, %v168, %v164
  %v170 = vlaneseq
  %v171 = vshrl.u32 %v170, 7
  %v172 = vsub.s32 %v95, %v171
  %v173 = vrot.slane %v76, %v172
  %v174 = vlaneseq
  %v175 = vshrl.u32 %v174, 7
  %v176 = vsub.s32 %v100, %v175
  %v177 = vrot.slane %v79, %v176
  %v178 = vsel %vm105, %v177, %v173
  %v179 = vlaneseq
  %v180 = vshrl.u32 %v179, 7
  %v181 = vsub.s32 %v107, %v180
  %v182 = vrot.slane %v82, %v181
  %v183 = vsel %vm112, %v182, %v178
  %v184 = vlaneseq
  %v185 = vshrl.u32 %v184, 7
  %v186 = vsub.s32 %v114, %v185
  %v187 = vrot.slane %v85, %v186
  %v188 = vsel %vm119, %v187, %v183
  %vm189 = vcmask 1043459
  %v190 = vsel %vm189, %v188, %v169
  %vm192 = vcmask 1041408
  %v193 = vsel %vm192, %v141, %v190
  %v194 = vld [vmem:[%s1] sm:$0xff]
  %v195 = vld [vmem:[%s1 + $0x8] sm:$0xff]
  %v196 = vld [vmem:[%s1 + $0x10] sm:$0xff]
  %v197 = vld [vmem:[%s1 + $0x18] sm:$0xff]
  %vm198 = vcmask 261120
  %v200 = vsel %vm198, %v193, 0
  %202 = vmatprep.subr.mxu0 0.0
  %203 = vmatpush1.msra.mxu0 %v194
  %204 = vmatprep.subr.mxu0 0.0
  %205 = vmatpush1.msra.mxu0 %v195
  %206 = vmatprep.subr.mxu0 0.0
  %207 = vmatpush1.msra.mxu0 %v196
  %208 = vmatprep.subr.mxu0 0.0
  %209 = vmatpush1.msra.mxu0 %v197
  %210 = vmatprep.subr.mxu0 0.0
  %211 = vmatpush1.msra.mxu0 0.0
  %212 = vmatprep.subr.mxu0 0.0
  %213 = vmatpush1.msra.mxu0 0.0
  %214 = vmatprep.subr.mxu0 0.0
  %215 = vmatpush1.msra.mxu0 0.0
  %216 = vmatprep.subr.mxu0 0.0
  %217 = vmatpush1.msra.mxu0 0.0
  %218 = vmatprep.subr.mxu0 0.0
  %219 = vmatpush1.msra.mxu0 0.0
  %220 = vmatprep.subr.mxu0 0.0
  %221 = vmatpush1.msra.mxu0 0.0
  %222 = vmatprep.subr.mxu0 0.0
  %223 = vmatpush1.msra.mxu0 0.0
  %224 = vmatprep.subr.mxu0 0.0
  %225 = vmatpush1.msra.mxu0 0.0
  %226 = vmatprep.subr.mxu0 0.0
  %227 = vmatpush1.msra.mxu0 0.0
  %228 = vmatprep.subr.mxu0 0.0
  %229 = vmatpush1.msra.mxu0 0.0
  %230 = vmatprep.subr.mxu0 0.0
  %231 = vmatpush1.msra.mxu0 0.0
  %232 = vmatprep.subr.mxu0 0.0
  %233 = vmatpush1.msra.mxu0 0.0
  %234 = vmatprep.subr.mxu0 0.0
  %235 = vmatpush1.msra.mxu0 0.0
  %236 = vmatprep.subr.mxu0 0.0
  %237 = vmatpush1.msra.mxu0 0.0
  %238 = vmatprep.subr.mxu0 0.0
  %239 = vmatpush1.msra.mxu0 0.0
  %240 = vmatprep.subr.mxu0 0.0
  %241 = vmatpush1.msra.mxu0 0.0
  %242 = vmatprep.subr.mxu0 0.0
  %243 = vmatpush1.msra.mxu0 0.0
  %244 = vmatprep.subr.mxu0 0.0
  %245 = vmatpush1.msra.mxu0 0.0
  %246 = vmatprep.subr.mxu0 0.0
  %247 = vmatpush1.msra.mxu0 0.0
  %248 = vmatprep.subr.mxu0 0.0
  %249 = vmatpush1.msra.mxu0 0.0
  %250 = vmatprep.subr.mxu0 0.0
  %251 = vmatpush1.msra.mxu0 0.0
  %252 = vmatprep.subr.mxu0 0.0
  %253 = vmatpush1.msra.mxu0 0.0
  %254 = vmatprep.subr.mxu0 0.0
  %255 = vmatpush1.msra.mxu0 0.0
  %256 = vmatprep.subr.mxu0 0.0
  %257 = vmatpush1.msra.mxu0 0.0
  %258 = vmatprep.subr.mxu0 0.0
  %259 = vmatpush1.msra.mxu0 0.0
  %260 = vmatprep.subr.mxu0 0.0
  %261 = vmatpush1.msra.mxu0 0.0
  %262 = vmatprep.subr.mxu0 0.0
  %263 = vmatpush1.msra.mxu0 0.0
  %264 = vmatprep.subr.mxu0 0.0
  %265 = vmatpush1.msra.mxu0 0.0
  %266 = vmatprep.mubr.f32.mxu0 0.0
  %267 = vmatmul.mubr.f32.gmra.mrb[0].mxu0 %v200
  %v268 = vpop.f32.mrb[0].mxu0
  %v269 = vadd.f32 0.0, %v268
  %v270 = vpop.f32.mrb[0].mxu0
  %271 = vdwg.mxu0
  %v272 = vmax.f32 %v269, 0.0
  %v273 = vld [vmem:[%s2] sm:$0xff]
  %vm274 = vcmask 64512
  %v276 = vsel %vm274, %v272, 0
  %278 = vmatprep.subr.mxu0 0.0
  %279 = vmatpush1.msra.mxu0 %v273
  %280 = vmatprep.subr.mxu0 0.0
  %281 = vmatpush1.msra.mxu0 0.0
  %282 = vmatprep.subr.mxu0 0.0
  %283 = vmatpush1.msra.mxu0 0.0
  %284 = vmatprep.subr.mxu0 0.0
  %285 = vmatpush1.msra.mxu0 0.0
  %286 = vmatprep.subr.mxu0 0.0
  %287 = vmatpush1.msra.mxu0 0.0
  %288 = vmatprep.subr.mxu0 0.0
  %289 = vmatpush1.msra.mxu0 0.0
  %290 = vmatprep.subr.mxu0 0.0
  %291 = vmatpush1.msra.mxu0 0.0
  %292 = vmatprep.subr.mxu0 0.0
  %293 = vmatpush1.msra.mxu0 0.0
  %294 = vmatprep.subr.mxu0 0.0
  %295 = vmatpush1.msra.mxu0 0.0
  %296 = vmatprep.subr.mxu0 0.0
  %297 = vmatpush1.msra.mxu0 0.0
  %298 = vmatprep.subr.mxu0 0.0
  %299 = vmatpush1.msra.mxu0 0.0
  %300 = vmatprep.subr.mxu0 0.0
  %301 = vmatpush1.msra.mxu0 0.0
  %302 = vmatprep.subr.mxu0 0.0
  %303 = vmatpush1.msra.mxu0 0.0
  %304 = vmatprep.subr.mxu0 0.0
  %305 = vmatpush1.msra.mxu0 0.0
  %306 = vmatprep.subr.mxu0 0.0
  %307 = vmatpush1.msra.mxu0 0.0
  %308 = vmatprep.subr.mxu0 0.0
  %309 = vmatpush1.msra.mxu0 0.0
  %310 = vmatprep.subr.mxu0 0.0
  %311 = vmatpush1.msra.mxu0 0.0
  %312 = vmatprep.subr.mxu0 0.0
  %313 = vmatpush1.msra.mxu0 0.0
  %314 = vmatprep.subr.mxu0 0.0
  %315 = vmatpush1.msra.mxu0 0.0
  %316 = vmatprep.subr.mxu0 0.0
  %317 = vmatpush1.msra.mxu0 0.0
  %318 = vmatprep.subr.mxu0 0.0
  %319 = vmatpush1.msra.mxu0 0.0
  %320 = vmatprep.subr.mxu0 0.0
  %321 = vmatpush1.msra.mxu0 0.0
  %322 = vmatprep.subr.mxu0 0.0
  %323 = vmatpush1.msra.mxu0 0.0
  %324 = vmatprep.subr.mxu0 0.0
  %325 = vmatpush1.msra.mxu0 0.0
  %326 = vmatprep.subr.mxu0 0.0
  %327 = vmatpush1.msra.mxu0 0.0
  %328 = vmatprep.subr.mxu0 0.0
  %329 = vmatpush1.msra.mxu0 0.0
  %330 = vmatprep.subr.mxu0 0.0
  %331 = vmatpush1.msra.mxu0 0.0
  %332 = vmatprep.subr.mxu0 0.0
  %333 = vmatpush1.msra.mxu0 0.0
  %334 = vmatprep.subr.mxu0 0.0
  %335 = vmatpush1.msra.mxu0 0.0
  %336 = vmatprep.subr.mxu0 0.0
  %337 = vmatpush1.msra.mxu0 0.0
  %338 = vmatprep.subr.mxu0 0.0
  %339 = vmatpush1.msra.mxu0 0.0
  %340 = vmatprep.subr.mxu0 0.0
  %341 = vmatpush1.msra.mxu0 0.0
  %342 = vmatprep.mubr.f32.mxu0 0.0
  %343 = vmatmul.mubr.f32.gmra.mrb[0].mxu0 %v276
  %v344 = vpop.f32.mrb[0].mxu0
  %v345 = vadd.f32 0.0, %v344
  %v346 = vpop.f32.mrb[0].mxu0
  %347 = vdwg.mxu0
  %v349 = vrot.slane %v345, 2
  %v351 = vadd.f32 %v345, %v349
  %v352 = vxor.u32 %v351, 2147483648
  %v353 = vmul.f32 %v352, 1.442695
  %v354 = vpow.pop %v353
  %v355 = vadd.f32 %v354, 1.0
  %v356 = vrcp.pop %v355
  %v357 = vmul.f32 1.0, %v356
  %v358 = vlaneseq
  %v359 = vshrl.u32 %v358, 7
  %v360 = vsub.s32 0, %v359
  %v361 = vrot.slane %v357, %v360
  %363 = vbcast.lane.b32.xlu0 %v361, 256
  %v364 = vpop.permute.xlu0 %363
  %s366 = sor.u32 256, 8
  %367 = vbcast.lane.b32.xlu0 %v361, %s366
  %v368 = vpop.permute.xlu0 %367
  %s370 = sor.u32 256, 16
  %371 = vbcast.lane.b32.xlu0 %v361, %s370
  %v372 = vpop.permute.xlu0 %371
  %s374 = sor.u32 256, 24
  %375 = vbcast.lane.b32.xlu0 %v361, %s374
  %v376 = vpop.permute.xlu0 %375
  %v377 = vlaneseq
  %v378 = vshrl.u32 %v377, 7
  %v379 = vsub.s32 1, %v378
  %v380 = vrot.slane %v357, %v379
  %382 = vbcast.lane.b32.xlu0 %v380, 256
  %v383 = vpop.permute.xlu0 %382
  %s385 = sor.u32 256, 8
  %386 = vbcast.lane.b32.xlu0 %v380, %s385
  %v387 = vpop.permute.xlu0 %386
  %s389 = sor.u32 256, 16
  %390 = vbcast.lane.b32.xlu0 %v380, %s389
  %v391 = vpop.permute.xlu0 %390
  %s393 = sor.u32 256, 24
  %394 = vbcast.lane.b32.xlu0 %v380, %s393
  %v395 = vpop.permute.xlu0 %394
  %v396 = vmul.f32 %v14, %v364
  %v397 = vmul.f32 %v15, %v364
  %v398 = vmul.f32 %v16, %v368
  %v399 = vmul.f32 %v17, %v368
  %v400 = vmul.f32 %v18, %v372
  %v401 = vmul.f32 %v19, %v372
  %v402 = vmul.f32 %v20, %v376
  %v403 = vmul.f32 %v21, %v376
  %v404 = vmul.f32 %v22, %v383
  %v405 = vmul.f32 %v23, %v383
  %v406 = vmul.f32 %v24, %v387
  %v407 = vmul.f32 %v25, %v387
  %v408 = vmul.f32 %v26, %v391
  %v409 = vmul.f32 %v27, %v391
  %v410 = vmul.f32 %v28, %v395
  %v411 = vmul.f32 %v29, %v395
  %412 = vst [vmem:[%s3] sm:$0xff] %v396
  %413 = vst [vmem:[%s3 + $0x8] sm:$0xff] %v397
  %414 = vst [vmem:[%s3 + $0x10] sm:$0xff] %v398
  %415 = vst [vmem:[%s3 + $0x18] sm:$0xff] %v399
  %416 = vst [vmem:[%s3 + $0x20] sm:$0xff] %v400
  %417 = vst [vmem:[%s3 + $0x28] sm:$0xff] %v401
  %418 = vst [vmem:[%s3 + $0x30] sm:$0xff] %v402
  %419 = vst [vmem:[%s3 + $0x38] sm:$0xff] %v403
  %420 = vst [vmem:[%s3 + $0x40] sm:$0xff] %v404
  %421 = vst [vmem:[%s3 + $0x48] sm:$0xff] %v405
  %422 = vst [vmem:[%s3 + $0x50] sm:$0xff] %v406
  %423 = vst [vmem:[%s3 + $0x58] sm:$0xff] %v407
  %424 = vst [vmem:[%s3 + $0x60] sm:$0xff] %v408
  %425 = vst [vmem:[%s3 + $0x68] sm:$0xff] %v409
  %426 = vst [vmem:[%s3 + $0x70] sm:$0xff] %v410
  %427 = vst [vmem:[%s3 + $0x78] sm:$0xff] %v411
  // Predicated region
  $region14: #{channel_attention.1} parent=0 // pred_check
    _
  $region15: #{channel_attention.1} parent=0 // pred_check_branch
    %429 = sbr.rel (0) target = $region17
  $region16: #{channel_attention.1} parent=0 // pred_region
    _
  $region17: #{channel_attention.1} parent=0 // pred_fallthru
    _
  // Predicated region
  $region18: #{channel_attention.1} parent=0 // pred_check
    _
  $region19: #{channel_attention.1} parent=0 // pred_check_branch
    %431 = sbr.rel (0) target = $region21
  $region20: #{channel_attention.1} parent=0 // pred_region
    _
  $region21: #{channel_attention.1} parent=0 // pred_fallthru
    _

</llo_original>
